<compile_context>
chip_gen: v5e
topology: v5e:2x2
jax: 0.10.0
libtpu: 0.0.40
codegen_flags: <defaults>
</compile_context>

<pallas_src>
import jax
import jax.numpy as jnp
import numpy as np
from jax.experimental import pallas as pl
from jax.experimental.pallas import tpu as pltpu


def _round_up(x, m):
    return ((x + m - 1) // m) * m


def _cdiv(a, b):
    return (a + b - 1) // b


def _sublane_pack(dtype):
    """Rows per sublane group: 8 for 4-byte, 16 for 2-byte, 32 for 1-byte dtypes."""
    return max(8, 32 // max(jnp.dtype(dtype).itemsize, 1))


def _vmem_capacity_bytes():
    try:
        return int(pltpu.get_tpu_info().vmem_capacity_bytes)
    except Exception:
        return 64 * 1024 * 1024     # conservative (v7x per-TC VMEM)


def _choose_tile_m(m_rows, c, in_itemsize, w_itemsize, sub, budget_bytes):
    """Largest token tile whose full working set (pipelined tiles + resident weight/bias
    + f32 in-kernel intermediates) fits the VMEM budget."""
    resident = c * c * w_itemsize + c * 4                 # single-buffered weight + bias
    per_row = 3 * 2 * c * in_itemsize + 3 * c * 4         # z/u/out (2-deep) + f32 acc/filt/prod
    tile = max(sub, (budget_bytes - resident) // per_row)
    tile = int(min(tile, 2048))
    if tile >= 256:
        tile = (tile // 256) * 256                        # MXU/vreg-friendly multiples
    else:
        tile = max((tile // sub) * sub, sub)
    m_cover = _round_up(max(m_rows, 1), sub)
    tile = min(tile, m_cover)
    # Large problems: keep at least 2 tiles so both v7x TensorCores get work.
    if m_rows > 1024 and tile >= m_cover:
        tile = _round_up(_cdiv(m_cover, 2), sub)
    return max(int(tile), sub)


def _even_grid_tile_m(m_rows, tile, sub):
    """Shrink tile_m slightly so cdiv(M, tile_m) is even (v7x: 2 TCs share the grid)."""
    g = _cdiv(m_rows, tile)
    if g <= 1 or g % 2 == 0:
        return tile
    target = g + 1
    while target <= 2 * g + 2:
        t = max(_round_up(_cdiv(m_rows, target), sub), sub)
        if _cdiv(m_rows, t) % 2 == 0:
            return t
        target += 2
    return tile


def _mfn_kernel(z_ref, u_ref, wt_ref, b_ref, o_ref):
    # z_ref:  (TM, C)   token tile (real channel width, no lane padding)
    # u_ref:  (TM, C)
    # wt_ref: (C, C)    weight already transposed to (in, out) -> plain NN matmul
    # b_ref:  (1, C)
    # o_ref:  (TM, C)
    zl = jnp.dot(z_ref[...], wt_ref[...], preferred_element_type=jnp.float32)
    zl = zl + b_ref[...].astype(jnp.float32)              # broadcast (1, C) over rows
    u_val = u_ref[...]
    if u_val.dtype == jnp.bfloat16:
        # packed-bf16 VALU path on v6e/v7x; output precision is bf16 anyway
        filt = jnp.sin(u_val).astype(jnp.float32)
    else:
        filt = jnp.sin(u_val.astype(jnp.float32))         # MFN 'fourier' filter
    o_ref[...] = (zl * filt).astype(o_ref.dtype)


def mfn_layer(z, u, weight, bias, *, vmem_budget_bytes=None):
    """z, u: (..., C).  weight: (C, C) in PyTorch Linear layout (out x in).  bias: (C,)."""
    orig_shape = z.shape
    C = orig_shape[-1]
    z2 = z.reshape(-1, C)
    u2 = u.reshape(-1, C)
    M = z2.shape[0]
    in_itemsize = jnp.dtype(z2.dtype).itemsize
    w_itemsize = jnp.dtype(weight.dtype).itemsize
    sub = _sublane_pack(z2.dtype)

    cap = _vmem_capacity_bytes()
    if vmem_budget_bytes is None:
        # ~55% of physical VMEM, never above 44 MiB (safe on v7x's 64 MiB, ample on 128 MiB chips)
        vmem_budget_bytes = min(int(cap * 0.55), 44 * 1024 * 1024)

    tile_m = _choose_tile_m(M, C, in_itemsize, w_itemsize, sub, vmem_budget_bytes)
    tile_m = _even_grid_tile_m(M, tile_m, sub)
    grid_m = _cdiv(M, tile_m)

    # One-time tiny transpose so the kernel contracts (TM,C)x(C,C) in plain NN form.
    w_t = weight.T
    b2 = bias.reshape(1, C)

    need = (3 * 2 * tile_m * C * in_itemsize      # double-buffered z/u/out tiles
            + 3 * tile_m * C * 4                  # f32 intermediates (acc, filter, product)
            + C * C * w_itemsize + C * 4)         # resident weight + bias
    vmem_limit = int(min(max(need + (8 << 20), 16 << 20), int(cap * 0.9)))

    cost = pl.CostEstimate(
        flops=2 * M * C * C,
        transcendentals=M * C,
        bytes_accessed=3 * M * C * in_itemsize + C * C * w_itemsize + C * 4)

    out = pl.pallas_call(
        _mfn_kernel,
        out_shape=jax.ShapeDtypeStruct((M, C), z2.dtype),
        grid_spec=pltpu.PrefetchScalarGridSpec(
            num_scalar_prefetch=0,
            grid=(grid_m,),
            in_specs=[
                pl.BlockSpec((tile_m, C), lambda i: (i, 0)),            # z tile
                pl.BlockSpec((tile_m, C), lambda i: (i, 0)),            # u tile
                pl.BlockSpec((C, C), lambda i: (0, 0),
                             pipeline_mode=pl.Buffered(1)),             # resident weight (in,out)
                pl.BlockSpec((1, C), lambda i: (0, 0),
                             pipeline_mode=pl.Buffered(1)),             # resident bias
            ],
            out_specs=pl.BlockSpec((tile_m, C), lambda i: (i, 0)),      # real-width output
        ),
        compiler_params=pltpu.CompilerParams(
            dimension_semantics=("parallel",),
            vmem_limit_bytes=vmem_limit),
        cost_estimate=cost,
    )(z2, u2, w_t, b2)

    return out.reshape(orig_shape)


def init_params(key, interm_channels):
    """Match PyTorch module init: weight ~ U(-sqrt(1/C), sqrt(1/C)); bias = default Linear init."""
    kw, kb = jax.random.split(key)
    bound_w = float(np.sqrt(1.0 / interm_channels))
    weight = jax.random.uniform(kw, (interm_channels, interm_channels),
                                minval=-bound_w, maxval=bound_w, dtype=jnp.float32)
    bound_b = 1.0 / float(np.sqrt(interm_channels))
    bias = jax.random.uniform(kb, (interm_channels,),
                              minval=-bound_b, maxval=bound_b, dtype=jnp.float32)
    return weight, bias


if __name__ == "__main__":
    key = jax.random.PRNGKey(0)
    k_params, kz, ku, kz2, ku2 = jax.random.split(key, 5)

    # Small demo shape consistent with the module: (batch, coords, interm_channels)
    B, N, C = 2, 8, 32
    weight, bias = init_params(k_params, C)
    z = jax.random.normal(kz, (B, N, C), dtype=jnp.float32)
    u = jax.random.normal(ku, (B, N, C), dtype=jnp.float32)

    out = jax.block_until_ready(mfn_layer(z, u, weight, bias))
    ref = (jnp.einsum("bnc,oc->bno", z, weight) + bias) * jnp.sin(u)
    np.testing.assert_allclose(np.asarray(out), np.asarray(ref), rtol=1e-5, atol=1e-5)

    # Second check: ragged token count exercises the masked partial-block path (no padding).
    B2, N2 = 3, 50
    z_b = jax.random.normal(kz2, (B2, N2, C), dtype=jnp.float32)
    u_b = jax.random.normal(ku2, (B2, N2, C), dtype=jnp.float32)
    out_b = jax.block_until_ready(mfn_layer(z_b, u_b, weight, bias))
    ref_b = (jnp.einsum("bnc,oc->bno", z_b, weight) + bias) * jnp.sin(u_b)
    np.testing.assert_allclose(np.asarray(out_b), np.asarray(ref_b), rtol=1e-5, atol=1e-5)

    print("KERNEL_OK")
</pallas_src>

<mosaic_0001>
module attributes {stable_mosaic.version = 11 : i64} {
  func.func @_mfn_kernel(%arg0: i32, %arg1: memref<16x32xf32, #tpu.memory_space<vmem>>, %arg2: memref<16x32xf32, #tpu.memory_space<vmem>>, %arg3: memref<32x32xf32, #tpu.memory_space<vmem>>, %arg4: memref<1x32xf32, #tpu.memory_space<vmem>>, %arg5: memref<16x32xf32, #tpu.memory_space<vmem>>) attributes {dimension_semantics = [#tpu.dimension_semantics<parallel>], iteration_bounds = array<i64: 1>, scalar_prefetch = 0 : i64, scratch_operands = 0 : i64, tpu.core_type = #tpu.core_type<tc>, window_params = [{transform_indices = @transform_0, window_bounds = array<i64: 16, 32>}, {transform_indices = @transform_1, window_bounds = array<i64: 16, 32>}, {pipeline_mode = #tpu.pipeline_mode<synchronous>, transform_indices = @transform_2, window_bounds = array<i64: 32, 32>}, {pipeline_mode = #tpu.pipeline_mode<synchronous>, transform_indices = @transform_3, window_bounds = array<i64: 1, 32>}, {transform_indices = @transform_4, window_bounds = array<i64: 16, 32>}]} {
    %c0 = arith.constant 0 : index
    %c0_0 = arith.constant 0 : index
    %0 = vector.load %arg1[%c0, %c0_0] : memref<16x32xf32, #tpu.memory_space<vmem>>, vector<16x32xf32>
    %c0_1 = arith.constant 0 : index
    %c0_2 = arith.constant 0 : index
    %1 = vector.load %arg3[%c0_1, %c0_2] : memref<32x32xf32, #tpu.memory_space<vmem>>, vector<32x32xf32>
    %cst = arith.constant dense<0.000000e+00> : vector<16x32xf32>
    %2 = tpu.matmul %0, %1, %cst {dimension_numbers = #tpu.dot_dimension_numbers<[1], [0], [0], [1], [0, 0, 1, 1], [], []>} : vector<16x32xf32>, vector<32x32xf32>, vector<16x32xf32> -> vector<16x32xf32>
    %c0_3 = arith.constant 0 : index
    %c0_4 = arith.constant 0 : index
    %3 = vector.load %arg4[%c0_3, %c0_4] : memref<1x32xf32, #tpu.memory_space<vmem>>, vector<1x32xf32>
    %4 = vector.broadcast %3 : vector<1x32xf32> to vector<16x32xf32>
    %5 = arith.addf %2, %4 : vector<16x32xf32>
    %c0_5 = arith.constant 0 : index
    %c0_6 = arith.constant 0 : index
    %6 = vector.load %arg2[%c0_5, %c0_6] : memref<16x32xf32, #tpu.memory_space<vmem>>, vector<16x32xf32>
    %7 = math.sin %6 : vector<16x32xf32>
    %8 = arith.mulf %5, %7 : vector<16x32xf32>
    %c0_7 = arith.constant 0 : index
    %c0_8 = arith.constant 0 : index
    %9 = vector.load %arg5[%c0_7, %c0_8] : memref<16x32xf32, #tpu.memory_space<vmem>>, vector<16x32xf32>
    tpu.vector_store %arg5[%c0_7, %c0_8], %8 {strides = array<i32>} : memref<16x32xf32, #tpu.memory_space<vmem>>, vector<16x32xf32>,
    return
  }
  func.func @transform_0(%arg0: i32) -> (i32, i32) {
    %c0_i32 = arith.constant 0 : i32
    %c0_i32_0 = arith.constant 0 : i32
    return %arg0, %c0_i32 : i32, i32
  }
  func.func @transform_1(%arg0: i32) -> (i32, i32) {
    %c0_i32 = arith.constant 0 : i32
    %c0_i32_0 = arith.constant 0 : i32
    return %arg0, %c0_i32 : i32, i32
  }
  func.func @transform_2(%arg0: i32) -> (i32, i32) {
    %c0_i32 = arith.constant 0 : i32
    %c0_i32_0 = arith.constant 0 : i32
    %c0_i32_1 = arith.constant 0 : i32
    return %c0_i32, %c0_i32_0 : i32, i32
  }
  func.func @transform_3(%arg0: i32) -> (i32, i32) {
    %c0_i32 = arith.constant 0 : i32
    %c0_i32_0 = arith.constant 0 : i32
    %c0_i32_1 = arith.constant 0 : i32
    return %c0_i32, %c0_i32_0 : i32, i32
  }
  func.func @transform_4(%arg0: i32) -> (i32, i32) {
    %c0_i32 = arith.constant 0 : i32
    %c0_i32_0 = arith.constant 0 : i32
    return %arg0, %c0_i32 : i32, i32
  }
}

</mosaic_0001>

<llo_original>
// kernel: tpu_custom_call.1
$region0: #{tpu_custom_call.1}
  #allocation0 [shape = 'u32[]', space=smem, size = 0x4, offset = 0x4, fixed_abs, tag = 'smem constant byte address 0x4 - core index']
  #allocation1 [shape = 'u32[72,128]{1,0:T(1,128)}', space=vmem, size = 0x9000, scoped, tag = 'internal scratch']
  %s0 = inlined_call_operand.hbm [shape: f32[16,32], index: 0, kind: input, shape index: {}]
  %s1 = inlined_call_operand.hbm [shape: f32[16,32], index: 1, kind: input, shape index: {}]
  %s2 = inlined_call_operand.hbm [shape: f32[32,32], index: 2, kind: input, shape index: {}]
  %s3 = inlined_call_operand.vmem [shape: f32[1,32], index: 3, kind: input, shape index: {}]
  %s4 = inlined_call_operand.hbm [shape: f32[16,32], index: 4, kind: output, shape index: {}]
  %s5 = sld [smem:[#allocation0]]
  $region38: #{tpu_custom_call.1} parent=0
    _
  %s7 = ssub.s32 1, %s5
  %s8 = scalar_select 0, %s7, %s5
  $region1: #{tpu_custom_call.1} parent=0
    #allocation2 [shape = 'u8[8192]{0}', space=vmem, size = 0x2000, scoped, tag = 'input window, operand 0, single buffered']
    #allocation3 [shape = 's32[1]{0}', space=sflag, size = 0x4, scoped, tag = 'scoped memory for tpu_custom_call.1']
    #allocation4 [shape = 's32[1]{0}', space=sflag, size = 0x4, scoped, tag = 'scoped memory for tpu_custom_call.1']
    #allocation5 [shape = 'u8[8192]{0}', space=vmem, size = 0x2000, scoped, tag = 'input window, operand 1, single buffered']
    #allocation6 [shape = 's32[1]{0}', space=sflag, size = 0x4, scoped, tag = 'scoped memory for tpu_custom_call.1']
    #allocation7 [shape = 'u8[16384]{0}', space=vmem, size = 0x4000, scoped, tag = 'input window, operand 2, single buffered']
    #allocation8 [shape = 'u8[8192]{0}', space=vmem, size = 0x2000, scoped, tag = 'output window, operand 0, single buffered']
    %9 = vsyncpa [#allocation3], 0
    %10 = vsyncpa [#allocation6], 0
    %11 = vsyncpa [#allocation4], 0
    // Predicated region
    $region2: #{tpu_custom_call.1} parent=1 // pred_check
      _
    $region3: #{tpu_custom_call.1} parent=1 // pred_check_branch
      %13 = sbr.rel (0) target = $region5
    $region4: #{tpu_custom_call.1} parent=1 // pred_region
      %15 = vsyncadd [#allocation3], 0
      %s16 = sshll.u32 %s0, 4
      %s17 = int_to_ptr.hbm [resolvable:$true] %s16
      %s18 = sshll.u32 [#allocation2], 4
      %s19 = int_to_ptr.vmem [resolvable:$true] %s18
      %24 = dma.hbm_to_vmem [thread:$0]  %s17, 256, %s19, [#allocation3], 128, 128, 8
    $region5: #{tpu_custom_call.1} parent=1 // pred_fallthru
      _
    // Predicated region
    $region6: #{tpu_custom_call.1} parent=1 // pred_check
      _
    $region7: #{tpu_custom_call.1} parent=1 // pred_check_branch
      %26 = sbr.rel (0) target = $region9
    $region8: #{tpu_custom_call.1} parent=1 // pred_region
      %28 = vsyncadd [#allocation6], 0
      %s29 = sshll.u32 %s1, 4
      %s30 = int_to_ptr.hbm [resolvable:$true] %s29
      %s31 = sshll.u32 [#allocation5], 4
      %s32 = int_to_ptr.vmem [resolvable:$true] %s31
      %37 = dma.hbm_to_vmem [thread:$0]  %s30, 256, %s32, [#allocation6], 128, 128, 8
    $region9: #{tpu_custom_call.1} parent=1 // pred_fallthru
      _
    // Predicated region
    $region10: #{tpu_custom_call.1} parent=1 // pred_check
      _
    $region11: #{tpu_custom_call.1} parent=1 // pred_check_branch
      %39 = sbr.rel (0) target = $region13
    $region12: #{tpu_custom_call.1} parent=1 // pred_region
      %41 = vsyncadd [#allocation6], 0
      %s42 = sshll.u32 %s2, 4
      %s43 = int_to_ptr.hbm [resolvable:$true] %s42
      %s44 = sshll.u32 [#allocation7], 4
      %s45 = int_to_ptr.vmem [resolvable:$true] %s44
      %50 = dma.hbm_to_vmem [thread:$0]  %s43, 512, %s45, [#allocation6], 128, 128, 8
    $region13: #{tpu_custom_call.1} parent=1 // pred_fallthru
      _
    // Predicated region
    $region14: #{tpu_custom_call.1} parent=1 // pred_check
      _
    $region15: #{tpu_custom_call.1} parent=1 // pred_check_branch
      %52 = sbr.rel (0) target = $region17
    $region16: #{tpu_custom_call.1} parent=1 // pred_region
      _
    $region17: #{tpu_custom_call.1} parent=1 // pred_fallthru
      _
    // Predicated region
    $region18: #{tpu_custom_call.1} parent=1 // pred_check
      _
    $region19: #{tpu_custom_call.1} parent=1 // pred_check_branch
      %54 = sbr.rel (0) target = $region21
    $region20: #{tpu_custom_call.1} parent=1 // pred_region
      %56 = dma.done [#allocation3], 256
    $region21: #{tpu_custom_call.1} parent=1 // pred_fallthru
      _
    // Predicated region
    $region22: #{tpu_custom_call.1} parent=1 // pred_check
      _
    $region23: #{tpu_custom_call.1} parent=1 // pred_check_branch
      %58 = sbr.rel (0) target = $region25
    $region24: #{tpu_custom_call.1} parent=1 // pred_region
      %60 = dma.done [#allocation6], 256
    $region25: #{tpu_custom_call.1} parent=1 // pred_fallthru
      _
    // Predicated region
    $region26: #{tpu_custom_call.1} parent=1 // pred_check
      _
    $region27: #{tpu_custom_call.1} parent=1 // pred_check_branch
      %62 = sbr.rel (0) target = $region29
    $region28: #{tpu_custom_call.1} parent=1 // pred_region
      %64 = dma.done [#allocation6], 512
    $region29: #{tpu_custom_call.1} parent=1 // pred_fallthru
      _
    %v65 = vld [vmem:[#allocation2] sm:$0xff]
    %v66 = vld [vmem:[#allocation2 + $0x8] sm:$0xff]
    %v67 = vld [vmem:[#allocation7] sm:$0xff]
    %v68 = vld [vmem:[#allocation7 + $0x8] sm:$0xff]
    %v69 = vld [vmem:[#allocation7 + $0x10] sm:$0xff]
    %v70 = vld [vmem:[#allocation7 + $0x18] sm:$0xff]
    %v71 = vld [vmem:[%s3] sm:$0x1]
    %v73 = vperm.slane %v71, 0
    %vm75 = vcmask 261120
    %v77 = vsel %vm75, %v65, 0
    %v80 = vsel %vm75, %v66, 0
    %82 = vmatpush.msra.mxu0 0.0
    %83 = vmatpush.msra.mxu0 0.0
    %84 = vmatpush.msra.mxu0 0.0
    %85 = vmatpush.msra.mxu0 0.0
    %86 = vmatpush.msra.mxu0 0.0
    %87 = vmatpush.msra.mxu0 0.0
    %88 = vmatpush.msra.mxu0 0.0
    %89 = vmatpush.msra.mxu0 0.0
    %90 = vmatpush.msra.mxu0 0.0
    %91 = vmatpush.msra.mxu0 0.0
    %92 = vmatpush.msra.mxu0 0.0
    %93 = vmatpush.msra.mxu0 0.0
    %94 = vmatpush.msra.mxu0 %v70
    %95 = vmatpush.msra.mxu0 %v69
    %96 = vmatpush.msra.mxu0 %v68
    %97 = vmatpush.msra.mxu0 %v67
    %98 = vmatmul.f32.gmra.mxu0 %v77
    %v99 = vpop.f32.mrf.mxu0
    %v100 = vadd.f32 %v73, %v99
    %101 = vmatmul.f32.gmra.mxu0 %v80
    %v102 = vpop.f32.mrf.mxu0
    %v103 = vadd.f32 %v73, %v102
    %104 = vdwg.mxu0
    %v105 = vld [vmem:[#allocation5] sm:$0xff]
    %v106 = vld [vmem:[#allocation5 + $0x8] sm:$0xff]
    %v107 = vand.u32 2147483647, %v105
    %vm108 = vcmp.le.f32.partialorder %v107, 0.7853982
    %vm109 = vcmp.lt.s32.totalorder %v105, 0
    %v110 = vand.u32 %v105, 2139095040
    %v111 = vshrl.u32 %v110, 23
    %v112 = vsub.s32 %v111, 127
    %v113 = vand.u32 2147483647, %v105
    %v114 = vand.u32 %v113, 8388607
    %v115 = vor.u32 %v114, 8388608
    %v116 = vsub.s32 0, %v115
    %v117 = vadd.s32 %v112, 1
    %vm118 = vcmp.gt.s32.totalorder %v117, 0
    %v119 = vsel %vm118, %v117, 0
    %v120 = vshrl.u32 %v119, 5
    %v121 = vand.u32 %v119, 31
    %v122 = vsub.s32 32, %v121
    %v123 = vshrl.u32 683565275, %v122
    %v124 = vshll.u32 683565275, %v121
    %v125 = vshrl.u32 2475754826, %v122
    %v126 = vor.u32 %v124, %v125
    %v127 = vshll.u32 2475754826, %v121
    %v128 = vshrl.u32 2131351028, %v122
    %v129 = vor.u32 %v127, %v128
    %v130 = vshll.u32 2131351028, %v121
    %v131 = vshrl.u32 2102212464, %v122
    %v132 = vor.u32 %v130, %v131
    %v133 = vshll.u32 2102212464, %v121
    %v134 = vshrl.u32 920167782, %v122
    %v135 = vor.u32 %v133, %v134
    %v136 = vshll.u32 920167782, %v121
    %v137 = vshrl.u32 1326507024, %v122
    %v138 = vor.u32 %v136, %v137
    %vm139 = vcmp.lt.s32.totalorder %v120, 1
    %vm140 = vcmp.lt.s32.totalorder %v120, 2
    %vm141 = vcmp.lt.s32.totalorder %v120, 3
    %vm142 = vcmp.lt.s32.totalorder %v120, 4
    %v143 = vsel %vm139, %v123, %v126
    %v144 = vsel %vm142, %v132, 2102212464
    %v145 = vsel %vm141, %v129, %v144
    %v146 = vsel %vm140, %v143, %v145
    %v147 = vsel %vm139, %v126, %v129
    %v148 = vsel %vm142, %v135, 920167782
    %v149 = vsel %vm141, %v132, %v148
    %v150 = vsel %vm140, %v147, %v149
    %v151 = vsel %vm139, %v129, %v132
    %v152 = vsel %vm142, %v138, 1326507024
    %v153 = vsel %vm141, %v135, %v152
    %v154 = vsel %vm140, %v151, %v153
    %v155 = vshll.u32 %v115, 8
    %v156 = vand.u32 %v155, 65535
    %v157 = vshrl.u32 %v155, 16
    %v158 = vand.u32 %v154, 65535
    %v159 = vshrl.u32 %v154, 16
    %v160 = vmul.u32 %v156, %v158
    %v161 = vmul.u32 %v156, %v159
    %v162 = vmul.u32 %v157, %v158
    %v163 = vmul.u32 %v157, %v159
    %v164 = vshll.u32 %v161, 16
    %v165 = vshrl.u32 %v161, 16
    %v166 = vshll.u32 %v162, 16
    %v167 = vshrl.u32 %v162, 16
    %vm168 = vc.u32 %v160, %v164
    %v169 = vsel %vm168, 1, 0
    %v170 = vadd.s32 %v160, %v164
    %v171 = vadd.s32 %v163, %v169
    %vm172 = vc.u32 %v170, %v166
    %v173 = vsel %vm172, 1, 0
    %v174 = vadd.s32 %v170, %v166
    %v175 = vadd.s32 %v171, %v173
    %v176 = vadd.s32 %v175, %v165
    %v177 = vadd.s32 %v176, %v167
    %v178 = vand.u32 %v155, 65535
    %v179 = vshrl.u32 %v155, 16
    %v180 = vand.u32 %v150, 65535
    %v181 = vshrl.u32 %v150, 16
    %v182 = vmul.u32 %v178, %v180
    %v183 = vmul.u32 %v178, %v181
    %v184 = vmul.u32 %v179, %v180
    %v185 = vmul.u32 %v179, %v181
    %v186 = vshll.u32 %v183, 16
    %v187 = vshrl.u32 %v183, 16
    %v188 = vshll.u32 %v184, 16
    %v189 = vshrl.u32 %v184, 16
    %vm190 = vc.u32 %v182, %v186
    %v191 = vsel %vm190, 1, 0
    %v192 = vadd.s32 %v182, %v186
    %v193 = vadd.s32 %v185, %v191
    %vm194 = vc.u32 %v192, %v188
    %v195 = vsel %vm194, 1, 0
    %v196 = vadd.s32 %v192, %v188
    %v197 = vadd.s32 %v193, %v195
    %v198 = vadd.s32 %v197, %v187
    %v199 = vadd.s32 %v198, %v189
    %v200 = vmul.u32 %v155, %v146
    %v201 = vadd.s32 %v177, %v196
    %vm202 = vc.u32 %v177, %v196
    %v203 = vadd.s32 %v199, 1
    %v204 = vsel %vm202, %v203, %v199
    %v205 = vadd.s32 %v200, %v204
    %v206 = vadd.s32 %v205, 536870912
    %v207 = vshrl.u32 %v206, 30
    %v208 = vshll.u32 %v207, 30
    %v209 = vsub.s32 %v205, %v208
    %vm210 = vcmp.lt.s32.totalorder %v209, 0
    %v211 = vsub.s32 0, %v209
    %v212 = vsel %vm210, %v211, %v209
    %v213 = vclz %v212
    %v214 = vsub.s32 %v213, 2
    %vm215 = vcmp.gt.s32.totalorder 0, %v214
    %v216 = vsel %vm215, 0, %v214
    %v217 = vsub.s32 32, %v216
    %v218 = vshll.u32 %v209, %v216
    %v219 = vshrl.u32 %v201, %v217
    %v220 = vor.u32 %v218, %v219
    %v221 = vsub.s32 4294967266, %v216
    %v222 = vadd.s32 %v221, 127
    %v223 = vshll.u32 %v222, 23
    %v224 = vor.u32 4788187, %v223
    %v225 = vand.u32 2147483647, %v224
    %v227 = vcvt.s32.f32 %v220
    %v228 = vmul.f32 %v227, %v225
    %v229 = vxor.u32 %v228, 2147483648
    %v230 = vsel %vm109, %v229, %v228
    %v231 = vsub.s32 4, %v207
    %v232 = vsel %vm109, %v231, %v207
    %v233 = vsel %vm108, %v105, %v230
    %v234 = vsel %vm108, 0, %v232
    %v235 = vmul.f32 %v233, %v233
    %v236 = vmul.f32 %v235, -0.001358992
    %v237 = vadd.f32 %v236, 0.041655596
    %v238 = vmul.f32 %v235, %v237
    %v239 = vadd.f32 %v238, -0.4999988
    %v240 = vmul.f32 %v235, %v239
    %v241 = vadd.f32 1.0, %v240
    %v242 = vmul.f32 %v233, %v233
    %v243 = vmul.f32 %v242, -0.00019511016
    %v244 = vadd.f32 %v243, 0.008332121
    %v245 = vmul.f32 %v242, %v244
    %v246 = vadd.f32 %v245, -0.16666654
    %v247 = vmul.f32 %v242, %v246
    %v248 = vadd.f32 %v247, 1.0
    %v249 = vmul.f32 %v248, %v233
    %vm250 = vweird.f32 %v105
    %v251 = vadd.s32 %v234, 3
    %v252 = vand.u32 %v251, 3
    %vm253 = vcmp.lt.s32.totalorder %v252, 2
    %vm254 = vcmp.eq.s32.totalorder %v252, 0
    %v255 = vxor.u32 %v249, 2147483648
    %v256 = vsel %vm254, %v241, %v255
    %vm257 = vcmp.eq.s32.totalorder %v252, 2
    %v258 = vxor.u32 %v241, 2147483648
    %v259 = vsel %vm257, %v258, %v249
    %v260 = vsel %vm253, %v256, %v259
    %v261 = vsel %vm250, nan, %v260
    %v262 = vand.u32 2147483647, %v106
    %vm263 = vcmp.le.f32.partialorder %v262, 0.7853982
    %vm264 = vcmp.lt.s32.totalorder %v106, 0
    %v265 = vand.u32 %v106, 2139095040
    %v266 = vshrl.u32 %v265, 23
    %v267 = vsub.s32 %v266, 127
    %v268 = vand.u32 2147483647, %v106
    %v269 = vand.u32 %v268, 8388607
    %v270 = vor.u32 %v269, 8388608
    %v271 = vsub.s32 0, %v270
    %v272 = vadd.s32 %v267, 1
    %vm273 = vcmp.gt.s32.totalorder %v272, 0
    %v274 = vsel %vm273, %v272, 0
    %v275 = vshrl.u32 %v274, 5
    %v276 = vand.u32 %v274, 31
    %v277 = vsub.s32 32, %v276
    %v278 = vshrl.u32 683565275, %v277
    %v279 = vshll.u32 683565275, %v276
    %v280 = vshrl.u32 2475754826, %v277
    %v281 = vor.u32 %v279, %v280
    %v282 = vshll.u32 2475754826, %v276
    %v283 = vshrl.u32 2131351028, %v277
    %v284 = vor.u32 %v282, %v283
    %v285 = vshll.u32 2131351028, %v276
    %v286 = vshrl.u32 2102212464, %v277
    %v287 = vor.u32 %v285, %v286
    %v288 = vshll.u32 2102212464, %v276
    %v289 = vshrl.u32 920167782, %v277
    %v290 = vor.u32 %v288, %v289
    %v291 = vshll.u32 920167782, %v276
    %v292 = vshrl.u32 1326507024, %v277
    %v293 = vor.u32 %v291, %v292
    %vm294 = vcmp.lt.s32.totalorder %v275, 1
    %vm295 = vcmp.lt.s32.totalorder %v275, 2
    %vm296 = vcmp.lt.s32.totalorder %v275, 3
    %vm297 = vcmp.lt.s32.totalorder %v275, 4
    %v298 = vsel %vm294, %v278, %v281
    %v299 = vsel %vm297, %v287, 2102212464
    %v300 = vsel %vm296, %v284, %v299
    %v301 = vsel %vm295, %v298, %v300
    %v302 = vsel %vm294, %v281, %v284
    %v303 = vsel %vm297, %v290, 920167782
    %v304 = vsel %vm296, %v287, %v303
    %v305 = vsel %vm295, %v302, %v304
    %v306 = vsel %vm294, %v284, %v287
    %v307 = vsel %vm297, %v293, 1326507024
    %v308 = vsel %vm296, %v290, %v307
    %v309 = vsel %vm295, %v306, %v308
    %v310 = vshll.u32 %v270, 8
    %v311 = vand.u32 %v310, 65535
    %v312 = vshrl.u32 %v310, 16
    %v313 = vand.u32 %v309, 65535
    %v314 = vshrl.u32 %v309, 16
    %v315 = vmul.u32 %v311, %v313
    %v316 = vmul.u32 %v311, %v314
    %v317 = vmul.u32 %v312, %v313
    %v318 = vmul.u32 %v312, %v314
    %v319 = vshll.u32 %v316, 16
    %v320 = vshrl.u32 %v316, 16
    %v321 = vshll.u32 %v317, 16
    %v322 = vshrl.u32 %v317, 16
    %vm323 = vc.u32 %v315, %v319
    %v324 = vsel %vm323, 1, 0
    %v325 = vadd.s32 %v315, %v319
    %v326 = vadd.s32 %v318, %v324
    %vm327 = vc.u32 %v325, %v321
    %v328 = vsel %vm327, 1, 0
    %v329 = vadd.s32 %v325, %v321
    %v330 = vadd.s32 %v326, %v328
    %v331 = vadd.s32 %v330, %v320
    %v332 = vadd.s32 %v331, %v322
    %v333 = vand.u32 %v310, 65535
    %v334 = vshrl.u32 %v310, 16
    %v335 = vand.u32 %v305, 65535
    %v336 = vshrl.u32 %v305, 16
    %v337 = vmul.u32 %v333, %v335
    %v338 = vmul.u32 %v333, %v336
    %v339 = vmul.u32 %v334, %v335
    %v340 = vmul.u32 %v334, %v336
    %v341 = vshll.u32 %v338, 16
    %v342 = vshrl.u32 %v338, 16
    %v343 = vshll.u32 %v339, 16
    %v344 = vshrl.u32 %v339, 16
    %vm345 = vc.u32 %v337, %v341
    %v346 = vsel %vm345, 1, 0
    %v347 = vadd.s32 %v337, %v341
    %v348 = vadd.s32 %v340, %v346
    %vm349 = vc.u32 %v347, %v343
    %v350 = vsel %vm349, 1, 0
    %v351 = vadd.s32 %v347, %v343
    %v352 = vadd.s32 %v348, %v350
    %v353 = vadd.s32 %v352, %v342
    %v354 = vadd.s32 %v353, %v344
    %v355 = vmul.u32 %v310, %v301
    %v356 = vadd.s32 %v332, %v351
    %vm357 = vc.u32 %v332, %v351
    %v358 = vadd.s32 %v354, 1
    %v359 = vsel %vm357, %v358, %v354
    %v360 = vadd.s32 %v355, %v359
    %v361 = vadd.s32 %v360, 536870912
    %v362 = vshrl.u32 %v361, 30
    %v363 = vshll.u32 %v362, 30
    %v364 = vsub.s32 %v360, %v363
    %vm365 = vcmp.lt.s32.totalorder %v364, 0
    %v366 = vsub.s32 0, %v364
    %v367 = vsel %vm365, %v366, %v364
    %v368 = vclz %v367
    %v369 = vsub.s32 %v368, 2
    %vm370 = vcmp.gt.s32.totalorder 0, %v369
    %v371 = vsel %vm370, 0, %v369
    %v372 = vsub.s32 32, %v371
    %v373 = vshll.u32 %v364, %v371
    %v374 = vshrl.u32 %v356, %v372
    %v375 = vor.u32 %v373, %v374
    %v376 = vsub.s32 4294967266, %v371
    %v377 = vadd.s32 %v376, 127
    %v378 = vshll.u32 %v377, 23
    %v379 = vor.u32 4788187, %v378
    %v380 = vand.u32 2147483647, %v379
    %v382 = vcvt.s32.f32 %v375
    %v383 = vmul.f32 %v382, %v380
    %v384 = vxor.u32 %v383, 2147483648
    %v385 = vsel %vm264, %v384, %v383
    %v386 = vsub.s32 4, %v362
    %v387 = vsel %vm264, %v386, %v362
    %v388 = vsel %vm263, %v106, %v385
    %v389 = vsel %vm263, 0, %v387
    %v390 = vmul.f32 %v388, %v388
    %v391 = vmul.f32 %v390, -0.001358992
    %v392 = vadd.f32 %v391, 0.041655596
    %v393 = vmul.f32 %v390, %v392
    %v394 = vadd.f32 %v393, -0.4999988
    %v395 = vmul.f32 %v390, %v394
    %v396 = vadd.f32 1.0, %v395
    %v397 = vmul.f32 %v388, %v388
    %v398 = vmul.f32 %v397, -0.00019511016
    %v399 = vadd.f32 %v398, 0.008332121
    %v400 = vmul.f32 %v397, %v399
    %v401 = vadd.f32 %v400, -0.16666654
    %v402 = vmul.f32 %v397, %v401
    %v403 = vadd.f32 %v402, 1.0
    %v404 = vmul.f32 %v403, %v388
    %vm405 = vweird.f32 %v106
    %v406 = vadd.s32 %v389, 3
    %v407 = vand.u32 %v406, 3
    %vm408 = vcmp.lt.s32.totalorder %v407, 2
    %vm409 = vcmp.eq.s32.totalorder %v407, 0
    %v410 = vxor.u32 %v404, 2147483648
    %v411 = vsel %vm409, %v396, %v410
    %vm412 = vcmp.eq.s32.totalorder %v407, 2
    %v413 = vxor.u32 %v396, 2147483648
    %v414 = vsel %vm412, %v413, %v404
    %v415 = vsel %vm408, %v411, %v414
    %v416 = vsel %vm405, nan, %v415
    %v417 = vmul.f32 %v100, %v261
    %v418 = vmul.f32 %v103, %v416
    %419 = vst.msk [vmem:[#allocation8] sm:$0xff] %vm75, %v417
    %420 = vst.msk [vmem:[#allocation8 + $0x8] sm:$0xff] %vm75, %v418
    // Predicated region
    $region30: #{tpu_custom_call.1} parent=1 // pred_check
      _
    $region31: #{tpu_custom_call.1} parent=1 // pred_check_branch
      %422 = sbr.rel (0) target = $region33
    $region32: #{tpu_custom_call.1} parent=1 // pred_region
      %424 = vsyncadd [#allocation4], 0
      %s425 = sshll.u32 [#allocation8], 4
      %s426 = int_to_ptr.vmem [resolvable:$true] %s425
      %s427 = sshll.u32 %s4, 4
      %s428 = int_to_ptr.hbm [resolvable:$true] %s427
      %433 = dma.vmem_to_hbm [thread:$0]  %s426, 256, %s428, [#allocation4], 128, 128, 8
    $region33: #{tpu_custom_call.1} parent=1 // pred_fallthru
      _
    // Predicated region
    $region34: #{tpu_custom_call.1} parent=1 // pred_check
      _
    $region35: #{tpu_custom_call.1} parent=1 // pred_check_branch
      %435 = sbr.rel (0) target = $region37
    $region36: #{tpu_custom_call.1} parent=1 // pred_region
      %437 = dma.done [#allocation4], 256
    $region37: #{tpu_custom_call.1} parent=1 // pred_fallthru
      _
    %438 = vsyncpa [#allocation3], 1
    %439 = vsyncpa [#allocation6], 1
    %440 = vsyncpa [#allocation4], 1

</llo_original>
